<compile_context>
chip_gen: v7x
topology: tpu7x:2x2x1
jax: 0.10.0
libtpu: 0.0.40
codegen_flags: <defaults>
</compile_context>

<pallas_src>
import functools

import jax
import jax.numpy as jnp
from jax.experimental import pallas as pl
from jax.experimental.pallas import tpu as pltpu

# Synthetic stand-ins for QuantumNetwork.STATE_SPACE / ACTION_SPACE
N_STATES = 16
N_ACTIONS = 8
HIDDEN = 50

# Lane-dense padded sizes (zero-filled padding keeps results exact).
HIDDEN_P = 128    # 50 -> 128
ACTIONS_P = 128   # 8  -> 128

_DEFAULT_TB = 1024  # batch tile (rows); multiple of 8, VMEM-cheap on all gens


def _round_up(n, m):
    return ((n + m - 1) // m) * m


def _net_kernel(x_ref, w1_ref, b1_ref, wo_ref, bo_ref, out_ref):
    # fc1 + relu: MXU matmul, VPU bias+relu, all on unmasked (8,128) vregs.
    h = jnp.dot(x_ref[...], w1_ref[...], preferred_element_type=jnp.float32)
    h = jnp.maximum(h + b1_ref[...], 0.0)          # (TB, HIDDEN_P)
    # out layer: lane-dense (TB, 128) store; logical columns sliced in wrapper.
    out_ref[...] = (
        jnp.dot(h, wo_ref[...], preferred_element_type=jnp.float32)
        + bo_ref[...]
    )


@functools.partial(jax.jit, static_argnames=("tb",))
def net_forward(x, w1, b1, wo, bo, *, tb=_DEFAULT_TB):
    """x: (B, N_STATES) f32 -> (B, N_ACTIONS) f32.

    Weights are stored pre-transposed and pre-padded:
      w1: (N_STATES, HIDDEN_P), b1: (1, HIDDEN_P)
      wo: (HIDDEN_P, ACTIONS_P), bo: (1, ACTIONS_P)
    with zeros in the padded columns/rows, so results match the unpadded net.
    """
    B = x.shape[0]
    # Tile size: multiple of 8 sublanes; don't exceed the (padded) batch.
    TB = min(tb, _round_up(B, 8))
    padded_B = _round_up(B, TB)
    if padded_B != B:
        x = jnp.pad(x, ((0, padded_B - B), (0, 0)))
    num_tiles = padded_B // TB

    # VMEM budget (double-buffered x/out tiles + resident weights), generous
    # headroom but well under v7x's 64 MiB physical VMEM.
    tile_bytes = 2 * TB * (N_STATES + ACTIONS_P) * 4
    weight_bytes = (N_STATES * HIDDEN_P + HIDDEN_P + HIDDEN_P * ACTIONS_P
                    + ACTIONS_P) * 4 * 2
    vmem_limit = min(4 * (tile_bytes + weight_bytes) + (4 << 20), 32 << 20)

    cost = pl.CostEstimate(
        flops=2 * padded_B * (N_STATES * HIDDEN_P + HIDDEN_P * ACTIONS_P),
        transcendentals=0,
        bytes_accessed=padded_B * (N_STATES + ACTIONS_P) * 4 + weight_bytes // 2,
    )

    out_padded = pl.pallas_call(
        _net_kernel,
        out_shape=jax.ShapeDtypeStruct((padded_B, ACTIONS_P), jnp.float32),
        grid=(num_tiles,),
        in_specs=[
            pl.BlockSpec((TB, N_STATES), lambda i: (i, 0)),        # x: streamed
            pl.BlockSpec((N_STATES, HIDDEN_P), lambda i: (0, 0)),  # weights:
            pl.BlockSpec((1, HIDDEN_P), lambda i: (0, 0)),         #   resident
            pl.BlockSpec((HIDDEN_P, ACTIONS_P), lambda i: (0, 0)),
            pl.BlockSpec((1, ACTIONS_P), lambda i: (0, 0)),
        ],
        out_specs=pl.BlockSpec((TB, ACTIONS_P), lambda i: (i, 0)),
        compiler_params=pltpu.CompilerParams(
            dimension_semantics=("parallel",),   # 2 TCs on v7x share the grid
            vmem_limit_bytes=int(vmem_limit),
        ),
        cost_estimate=cost,
    )(x, w1, b1, wo, bo)

    # Free layout plumbing: drop batch padding and padded action lanes.
    return out_padded[:B, :N_ACTIONS]


def init_params(key):
    """Parameter init mirroring the PyTorch module: weights ~ Normal(0, 0.1);
    biases use the PyTorch Linear default U(-1/sqrt(fan_in), 1/sqrt(fan_in)).
    Stored pre-transposed (in, out) and zero-padded to lane-dense shapes."""
    k1, k2, k3, k4 = jax.random.split(key, 4)
    w1 = 0.1 * jax.random.normal(k1, (N_STATES, HIDDEN), dtype=jnp.float32)
    b1 = jax.random.uniform(
        k2, (1, HIDDEN), dtype=jnp.float32,
        minval=-1.0 / jnp.sqrt(N_STATES), maxval=1.0 / jnp.sqrt(N_STATES))
    wo = 0.1 * jax.random.normal(k3, (HIDDEN, N_ACTIONS), dtype=jnp.float32)
    bo = jax.random.uniform(
        k4, (1, N_ACTIONS), dtype=jnp.float32,
        minval=-1.0 / jnp.sqrt(HIDDEN), maxval=1.0 / jnp.sqrt(HIDDEN))
    # fc2 exists in __init__ but is unused in forward(); omitted here.

    # Zero-pad to lane-dense shapes (exactness: relu(0+0)=0 and zero wo rows).
    w1_p = jnp.zeros((N_STATES, HIDDEN_P), jnp.float32).at[:, :HIDDEN].set(w1)
    b1_p = jnp.zeros((1, HIDDEN_P), jnp.float32).at[:, :HIDDEN].set(b1)
    wo_p = jnp.zeros((HIDDEN_P, ACTIONS_P), jnp.float32).at[:HIDDEN, :N_ACTIONS].set(wo)
    bo_p = jnp.zeros((1, ACTIONS_P), jnp.float32).at[:, :N_ACTIONS].set(bo)
    return (w1_p, b1_p, wo_p, bo_p), (w1, b1, wo, bo)


if __name__ == "__main__":
    key = jax.random.PRNGKey(0)
    pkey, xkey = jax.random.split(key)
    (w1_p, b1_p, wo_p, bo_p), (w1, b1, wo, bo) = init_params(pkey)

    B = 4  # small demo batch; wrapper pads to 8 sublane rows internally
    x = jax.random.normal(xkey, (B, N_STATES), dtype=jnp.float32)

    out = net_forward(x, w1_p, b1_p, wo_p, bo_p)
    out = jax.block_until_ready(out)

    # reference check against the unpadded logical network in plain JAX
    ref = jnp.maximum(x @ w1 + b1, 0.0) @ wo + bo
    assert out.shape == (B, N_ACTIONS)
    assert jnp.allclose(out, ref, atol=1e-5, rtol=1e-5)

    print("KERNEL_OK")
</pallas_src>

<mosaic_0001>
module attributes {stable_mosaic.version = 11 : i64} {
  func.func @_net_kernel(%arg0: i32, %arg1: memref<8x16xf32, #tpu.memory_space<vmem>>, %arg2: memref<16x128xf32, #tpu.memory_space<vmem>>, %arg3: memref<1x128xf32, #tpu.memory_space<vmem>>, %arg4: memref<128x128xf32, #tpu.memory_space<vmem>>, %arg5: memref<1x128xf32, #tpu.memory_space<vmem>>, %arg6: memref<8x128xf32, #tpu.memory_space<vmem>>) attributes {dimension_semantics = [#tpu.dimension_semantics<parallel>], iteration_bounds = array<i64: 1>, scalar_prefetch = 0 : i64, scratch_operands = 0 : i64, tpu.core_type = #tpu.core_type<tc>, window_params = [{transform_indices = @transform_0, window_bounds = array<i64: 8, 16>}, {pipeline_mode = #tpu.pipeline_mode<synchronous>, transform_indices = @transform_1, window_bounds = array<i64: 16, 128>}, {pipeline_mode = #tpu.pipeline_mode<synchronous>, transform_indices = @transform_2, window_bounds = array<i64: 1, 128>}, {pipeline_mode = #tpu.pipeline_mode<synchronous>, transform_indices = @transform_3, window_bounds = array<i64: 128, 128>}, {pipeline_mode = #tpu.pipeline_mode<synchronous>, transform_indices = @transform_4, window_bounds = array<i64: 1, 128>}, {transform_indices = @transform_5, window_bounds = array<i64: 8, 128>}]} {
    %c0 = arith.constant 0 : index
    %c0_0 = arith.constant 0 : index
    %0 = vector.load %arg1[%c0, %c0_0] : memref<8x16xf32, #tpu.memory_space<vmem>>, vector<8x16xf32>
    %c0_1 = arith.constant 0 : index
    %c0_2 = arith.constant 0 : index
    %1 = vector.load %arg2[%c0_1, %c0_2] : memref<16x128xf32, #tpu.memory_space<vmem>>, vector<16x128xf32>
    %cst = arith.constant dense<0.000000e+00> : vector<8x128xf32>
    %2 = tpu.matmul %0, %1, %cst {dimension_numbers = #tpu.dot_dimension_numbers<[1], [0], [0], [1], [0, 0, 1, 1], [], []>} : vector<8x16xf32>, vector<16x128xf32>, vector<8x128xf32> -> vector<8x128xf32>
    %c0_3 = arith.constant 0 : index
    %c0_4 = arith.constant 0 : index
    %3 = vector.load %arg3[%c0_3, %c0_4] : memref<1x128xf32, #tpu.memory_space<vmem>>, vector<1x128xf32>
    %4 = vector.broadcast %3 : vector<1x128xf32> to vector<8x128xf32>
    %5 = arith.addf %2, %4 : vector<8x128xf32>
    %cst_5 = arith.constant 0.000000e+00 : f32
    %6 = vector.broadcast %cst_5 : f32 to vector<8x128xf32>
    %7 = arith.maximumf %5, %6 : vector<8x128xf32>
    %c0_6 = arith.constant 0 : index
    %c0_7 = arith.constant 0 : index
    %8 = vector.load %arg4[%c0_6, %c0_7] : memref<128x128xf32, #tpu.memory_space<vmem>>, vector<128x128xf32>
    %cst_8 = arith.constant dense<0.000000e+00> : vector<8x128xf32>
    %9 = tpu.matmul %7, %8, %cst_8 {dimension_numbers = #tpu.dot_dimension_numbers<[1], [0], [0], [1], [0, 0, 1, 1], [], []>} : vector<8x128xf32>, vector<128x128xf32>, vector<8x128xf32> -> vector<8x128xf32>
    %c0_9 = arith.constant 0 : index
    %c0_10 = arith.constant 0 : index
    %10 = vector.load %arg5[%c0_9, %c0_10] : memref<1x128xf32, #tpu.memory_space<vmem>>, vector<1x128xf32>
    %11 = vector.broadcast %10 : vector<1x128xf32> to vector<8x128xf32>
    %12 = arith.addf %9, %11 : vector<8x128xf32>
    %c0_11 = arith.constant 0 : index
    %c0_12 = arith.constant 0 : index
    %13 = vector.load %arg6[%c0_11, %c0_12] : memref<8x128xf32, #tpu.memory_space<vmem>>, vector<8x128xf32>
    tpu.vector_store %arg6[%c0_11, %c0_12], %12 {strides = array<i32>} : memref<8x128xf32, #tpu.memory_space<vmem>>, vector<8x128xf32>,
    return
  }
  func.func @transform_0(%arg0: i32) -> (i32, i32) {
    %c0_i32 = arith.constant 0 : i32
    %c0_i32_0 = arith.constant 0 : i32
    return %arg0, %c0_i32 : i32, i32
  }
  func.func @transform_1(%arg0: i32) -> (i32, i32) {
    %c0_i32 = arith.constant 0 : i32
    %c0_i32_0 = arith.constant 0 : i32
    %c0_i32_1 = arith.constant 0 : i32
    return %c0_i32, %c0_i32_0 : i32, i32
  }
  func.func @transform_2(%arg0: i32) -> (i32, i32) {
    %c0_i32 = arith.constant 0 : i32
    %c0_i32_0 = arith.constant 0 : i32
    %c0_i32_1 = arith.constant 0 : i32
    return %c0_i32, %c0_i32_0 : i32, i32
  }
  func.func @transform_3(%arg0: i32) -> (i32, i32) {
    %c0_i32 = arith.constant 0 : i32
    %c0_i32_0 = arith.constant 0 : i32
    %c0_i32_1 = arith.constant 0 : i32
    return %c0_i32, %c0_i32_0 : i32, i32
  }
  func.func @transform_4(%arg0: i32) -> (i32, i32) {
    %c0_i32 = arith.constant 0 : i32
    %c0_i32_0 = arith.constant 0 : i32
    %c0_i32_1 = arith.constant 0 : i32
    return %c0_i32, %c0_i32_0 : i32, i32
  }
  func.func @transform_5(%arg0: i32) -> (i32, i32) {
    %c0_i32 = arith.constant 0 : i32
    %c0_i32_0 = arith.constant 0 : i32
    return %arg0, %c0_i32 : i32, i32
  }
}

</mosaic_0001>

<llo_original>
// kernel: net_forward.1
$region0: #{net_forward.1}
  #allocation0 [shape = 'u32[]', space=smem, size = 0x4, offset = 0x4, fixed_abs, tag = 'smem constant byte address 0x4 - core index']
  #allocation1 [shape = 'u32[144,128]{1,0:T(1,128)}', space=vmem, size = 0x12000, scoped, tag = 'internal scratch']
  %s0 = inlined_call_operand.vmem [shape: f32[8,16], index: 0, kind: input, shape index: {}]
  %s1 = inlined_call_operand.vmem [shape: f32[16,128], index: 1, kind: input, shape index: {}]
  %s2 = inlined_call_operand.vmem [shape: f32[1,128], index: 2, kind: input, shape index: {}]
  %s3 = inlined_call_operand.hbm [shape: f32[128,128], index: 3, kind: input, shape index: {}]
  %s4 = inlined_call_operand.vmem [shape: f32[1,128], index: 4, kind: input, shape index: {}]
  %s5 = inlined_call_operand.vmem [shape: f32[8,128], index: 5, kind: output, shape index: {}]
  %s6 = sld [smem:[#allocation0]]
  $region34: #{net_forward.1} parent=0
    _
  %s8 = ssub.s32 1, %s6
  %s9 = scalar_select 0, %s8, %s6
  $region1: #{net_forward.1} parent=0
    #allocation2 [shape = 'u8[65536]{0}', space=vmem, size = 0x10000, scoped, tag = 'input window, operand 3, single buffered']
    #allocation3 [shape = 's32[1]{0}', space=sflag, size = 0x4, scoped, tag = 'scoped memory for net_forward.1']
    %10 = vsyncpa [#allocation3], 0
    // Predicated region
    $region2: #{net_forward.1} parent=1 // pred_check
      _
    $region3: #{net_forward.1} parent=1 // pred_check_branch
      %12 = sbr.rel (0) target = $region5
    $region4: #{net_forward.1} parent=1 // pred_region
      _
    $region5: #{net_forward.1} parent=1 // pred_fallthru
      _
    // Predicated region
    $region6: #{net_forward.1} parent=1 // pred_check
      _
    $region7: #{net_forward.1} parent=1 // pred_check_branch
      %14 = sbr.rel (0) target = $region9
    $region8: #{net_forward.1} parent=1 // pred_region
      _
    $region9: #{net_forward.1} parent=1 // pred_fallthru
      _
    // Predicated region
    $region10: #{net_forward.1} parent=1 // pred_check
      _
    $region11: #{net_forward.1} parent=1 // pred_check_branch
      %16 = sbr.rel (0) target = $region13
    $region12: #{net_forward.1} parent=1 // pred_region
      _
    $region13: #{net_forward.1} parent=1 // pred_fallthru
      _
    // Predicated region
    $region14: #{net_forward.1} parent=1 // pred_check
      _
    $region15: #{net_forward.1} parent=1 // pred_check_branch
      %18 = sbr.rel (0) target = $region17
    $region16: #{net_forward.1} parent=1 // pred_region
      %s20 = ssub.s32 2048, 2048
      %21 = vsyncadd [#allocation3], %s20
      %s22 = sshll.u32 [#allocation2], 4
      %s23 = int_to_ptr.vmem [resolvable:$true] %s22
      %28 = dma.hbm_to_vmem [thread:$0]  %s3, 2048, %s23, [#allocation3], 128, 128, 8
    $region17: #{net_forward.1} parent=1 // pred_fallthru
      _
    // Predicated region
    $region18: #{net_forward.1} parent=1 // pred_check
      _
    $region19: #{net_forward.1} parent=1 // pred_check_branch
      %30 = sbr.rel (0) target = $region21
    $region20: #{net_forward.1} parent=1 // pred_region
      _
    $region21: #{net_forward.1} parent=1 // pred_fallthru
      _
    // Predicated region
    $region22: #{net_forward.1} parent=1 // pred_check
      _
    $region23: #{net_forward.1} parent=1 // pred_check_branch
      %32 = sbr.rel (0) target = $region25
    $region24: #{net_forward.1} parent=1 // pred_region
      %33 = dma.done [#allocation3], 2048
    $region25: #{net_forward.1} parent=1 // pred_fallthru
      _
    %v34 = vld [vmem:[%s0] sm:$0xff]
    %v35 = vld [vmem:[%s1] sm:$0xff]
    %v36 = vld [vmem:[%s1 + $0x8] sm:$0xff]
    %v37 = vld [vmem:[%s2] sm:$0x1]
    %v39 = vlaneseq
    %v40 = vshrl.u32 %v39, 7
    %v41 = vsub.s32 0, %v40
    %v42 = vrot.slane %v37, %v41
    %vm44 = vcmask 130048
    %v46 = vsel %vm44, %v34, 0
    %48 = vmatprep.subr.mxu0 0.0
    %49 = vmatpush1.msra.mxu0 %v35
    %50 = vmatprep.subr.mxu0 0.0
    %51 = vmatpush1.msra.mxu0 %v36
    %52 = vmatprep.subr.mxu0 0.0
    %53 = vmatpush1.msra.mxu0 0.0
    %54 = vmatprep.subr.mxu0 0.0
    %55 = vmatpush1.msra.mxu0 0.0
    %56 = vmatprep.subr.mxu0 0.0
    %57 = vmatpush1.msra.mxu0 0.0
    %58 = vmatprep.subr.mxu0 0.0
    %59 = vmatpush1.msra.mxu0 0.0
    %60 = vmatprep.subr.mxu0 0.0
    %61 = vmatpush1.msra.mxu0 0.0
    %62 = vmatprep.subr.mxu0 0.0
    %63 = vmatpush1.msra.mxu0 0.0
    %64 = vmatprep.subr.mxu0 0.0
    %65 = vmatpush1.msra.mxu0 0.0
    %66 = vmatprep.subr.mxu0 0.0
    %67 = vmatpush1.msra.mxu0 0.0
    %68 = vmatprep.subr.mxu0 0.0
    %69 = vmatpush1.msra.mxu0 0.0
    %70 = vmatprep.subr.mxu0 0.0
    %71 = vmatpush1.msra.mxu0 0.0
    %72 = vmatprep.subr.mxu0 0.0
    %73 = vmatpush1.msra.mxu0 0.0
    %74 = vmatprep.subr.mxu0 0.0
    %75 = vmatpush1.msra.mxu0 0.0
    %76 = vmatprep.subr.mxu0 0.0
    %77 = vmatpush1.msra.mxu0 0.0
    %78 = vmatprep.subr.mxu0 0.0
    %79 = vmatpush1.msra.mxu0 0.0
    %80 = vmatprep.subr.mxu0 0.0
    %81 = vmatpush1.msra.mxu0 0.0
    %82 = vmatprep.subr.mxu0 0.0
    %83 = vmatpush1.msra.mxu0 0.0
    %84 = vmatprep.subr.mxu0 0.0
    %85 = vmatpush1.msra.mxu0 0.0
    %86 = vmatprep.subr.mxu0 0.0
    %87 = vmatpush1.msra.mxu0 0.0
    %88 = vmatprep.subr.mxu0 0.0
    %89 = vmatpush1.msra.mxu0 0.0
    %90 = vmatprep.subr.mxu0 0.0
    %91 = vmatpush1.msra.mxu0 0.0
    %92 = vmatprep.subr.mxu0 0.0
    %93 = vmatpush1.msra.mxu0 0.0
    %94 = vmatprep.subr.mxu0 0.0
    %95 = vmatpush1.msra.mxu0 0.0
    %96 = vmatprep.subr.mxu0 0.0
    %97 = vmatpush1.msra.mxu0 0.0
    %98 = vmatprep.subr.mxu0 0.0
    %99 = vmatpush1.msra.mxu0 0.0
    %100 = vmatprep.subr.mxu0 0.0
    %101 = vmatpush1.msra.mxu0 0.0
    %102 = vmatprep.subr.mxu0 0.0
    %103 = vmatpush1.msra.mxu0 0.0
    %104 = vmatprep.subr.mxu0 0.0
    %105 = vmatpush1.msra.mxu0 0.0
    %106 = vmatprep.subr.mxu0 0.0
    %107 = vmatpush1.msra.mxu0 0.0
    %108 = vmatprep.subr.mxu0 0.0
    %109 = vmatpush1.msra.mxu0 0.0
    %110 = vmatprep.subr.mxu0 0.0
    %111 = vmatpush1.msra.mxu0 0.0
    %112 = vmatprep.mubr.f32.mxu0 0.0
    %113 = vmatmul.mubr.f32.gmra.mrb[0].mxu0 %v46
    %v114 = vpop.f32.mrb[0].mxu0
    %v115 = vadd.f32 %v42, %v114
    %v116 = vpop.f32.mrb[0].mxu0
    %117 = vdwg.mxu0
    %v118 = vmax.f32 %v115, 0.0
    %v119 = vld [vmem:[#allocation2] sm:$0xff]
    %v120 = vld [vmem:[#allocation2 + $0x8] sm:$0xff]
    %v121 = vld [vmem:[#allocation2 + $0x10] sm:$0xff]
    %v122 = vld [vmem:[#allocation2 + $0x18] sm:$0xff]
    %v123 = vld [vmem:[#allocation2 + $0x20] sm:$0xff]
    %v124 = vld [vmem:[#allocation2 + $0x28] sm:$0xff]
    %v125 = vld [vmem:[#allocation2 + $0x30] sm:$0xff]
    %v126 = vld [vmem:[#allocation2 + $0x38] sm:$0xff]
    %v127 = vld [vmem:[#allocation2 + $0x40] sm:$0xff]
    %v128 = vld [vmem:[#allocation2 + $0x48] sm:$0xff]
    %v129 = vld [vmem:[#allocation2 + $0x50] sm:$0xff]
    %v130 = vld [vmem:[#allocation2 + $0x58] sm:$0xff]
    %v131 = vld [vmem:[#allocation2 + $0x60] sm:$0xff]
    %v132 = vld [vmem:[#allocation2 + $0x68] sm:$0xff]
    %v133 = vld [vmem:[#allocation2 + $0x70] sm:$0xff]
    %v134 = vld [vmem:[#allocation2 + $0x78] sm:$0xff]
    %v135 = vld [vmem:[%s4] sm:$0x1]
    %v137 = vlaneseq
    %v138 = vshrl.u32 %v137, 7
    %v139 = vsub.s32 0, %v138
    %v140 = vrot.slane %v135, %v139
    %142 = vmatprep.subr.mxu0 0.0
    %143 = vmatpush1.msra.mxu0 %v119
    %144 = vmatprep.subr.mxu0 0.0
    %145 = vmatpush1.msra.mxu0 %v120
    %146 = vmatprep.subr.mxu0 0.0
    %147 = vmatpush1.msra.mxu0 %v121
    %148 = vmatprep.subr.mxu0 0.0
    %149 = vmatpush1.msra.mxu0 %v122
    %150 = vmatprep.subr.mxu0 0.0
    %151 = vmatpush1.msra.mxu0 %v123
    %152 = vmatprep.subr.mxu0 0.0
    %153 = vmatpush1.msra.mxu0 %v124
    %154 = vmatprep.subr.mxu0 0.0
    %155 = vmatpush1.msra.mxu0 %v125
    %156 = vmatprep.subr.mxu0 0.0
    %157 = vmatpush1.msra.mxu0 %v126
    %158 = vmatprep.subr.mxu0 0.0
    %159 = vmatpush1.msra.mxu0 %v127
    %160 = vmatprep.subr.mxu0 0.0
    %161 = vmatpush1.msra.mxu0 %v128
    %162 = vmatprep.subr.mxu0 0.0
    %163 = vmatpush1.msra.mxu0 %v129
    %164 = vmatprep.subr.mxu0 0.0
    %165 = vmatpush1.msra.mxu0 %v130
    %166 = vmatprep.subr.mxu0 0.0
    %167 = vmatpush1.msra.mxu0 %v131
    %168 = vmatprep.subr.mxu0 0.0
    %169 = vmatpush1.msra.mxu0 %v132
    %170 = vmatprep.subr.mxu0 0.0
    %171 = vmatpush1.msra.mxu0 %v133
    %172 = vmatprep.subr.mxu0 0.0
    %173 = vmatpush1.msra.mxu0 %v134
    %174 = vmatprep.subr.mxu0 0.0
    %175 = vmatpush1.msra.mxu0 0.0
    %176 = vmatprep.subr.mxu0 0.0
    %177 = vmatpush1.msra.mxu0 0.0
    %178 = vmatprep.subr.mxu0 0.0
    %179 = vmatpush1.msra.mxu0 0.0
    %180 = vmatprep.subr.mxu0 0.0
    %181 = vmatpush1.msra.mxu0 0.0
    %182 = vmatprep.subr.mxu0 0.0
    %183 = vmatpush1.msra.mxu0 0.0
    %184 = vmatprep.subr.mxu0 0.0
    %185 = vmatpush1.msra.mxu0 0.0
    %186 = vmatprep.subr.mxu0 0.0
    %187 = vmatpush1.msra.mxu0 0.0
    %188 = vmatprep.subr.mxu0 0.0
    %189 = vmatpush1.msra.mxu0 0.0
    %190 = vmatprep.subr.mxu0 0.0
    %191 = vmatpush1.msra.mxu0 0.0
    %192 = vmatprep.subr.mxu0 0.0
    %193 = vmatpush1.msra.mxu0 0.0
    %194 = vmatprep.subr.mxu0 0.0
    %195 = vmatpush1.msra.mxu0 0.0
    %196 = vmatprep.subr.mxu0 0.0
    %197 = vmatpush1.msra.mxu0 0.0
    %198 = vmatprep.subr.mxu0 0.0
    %199 = vmatpush1.msra.mxu0 0.0
    %200 = vmatprep.subr.mxu0 0.0
    %201 = vmatpush1.msra.mxu0 0.0
    %202 = vmatprep.subr.mxu0 0.0
    %203 = vmatpush1.msra.mxu0 0.0
    %204 = vmatprep.subr.mxu0 0.0
    %205 = vmatpush1.msra.mxu0 0.0
    %206 = vmatprep.mubr.f32.mxu0 0.0
    %207 = vmatmul.mubr.f32.gmra.mrb[0].mxu0 %v118
    %v208 = vpop.f32.mrb[0].mxu0
    %v209 = vadd.f32 %v140, %v208
    %v210 = vpop.f32.mrb[0].mxu0
    %211 = vdwg.mxu0
    %212 = vst [vmem:[%s5] sm:$0xff] %v209
    // Predicated region
    $region26: #{net_forward.1} parent=1 // pred_check
      _
    $region27: #{net_forward.1} parent=1 // pred_check_branch
      %214 = sbr.rel (0) target = $region29
    $region28: #{net_forward.1} parent=1 // pred_region
      _
    $region29: #{net_forward.1} parent=1 // pred_fallthru
      _
    // Predicated region
    $region30: #{net_forward.1} parent=1 // pred_check
      _
    $region31: #{net_forward.1} parent=1 // pred_check_branch
      %216 = sbr.rel (0) target = $region33
    $region32: #{net_forward.1} parent=1 // pred_region
      _
    $region33: #{net_forward.1} parent=1 // pred_fallthru
      _
    %217 = vsyncpa [#allocation3], 1

</llo_original>
